<compile_context>
chip_gen: v5e
topology: v5e:2x2
jax: 0.10.0
libtpu: 0.0.40
codegen_flags: <defaults>
</compile_context>

<pallas_src>
import functools

import jax
import jax.numpy as jnp
from jax.experimental import pallas as pl
from jax.experimental.pallas import tpu as pltpu


def _mha1_kernel(v_ref, attn_ref, wv_ref, bv_ref, wo_ref, bo_ref,
                 gamma_ref, beta_ref, o_ref, *, num_heads, eps):
    """One batch element per grid step.

    v_ref    : (1, N, E)     bf16
    attn_ref : (1, H, NQ, N) bf16
    wv_ref   : (E, D) bf16   bv_ref: (1, D) f32
    wo_ref   : (D, E) bf16   bo_ref: (1, E) f32
    gamma/beta: (1, E) f32
    o_ref    : (1, NQ, E) f32
    """
    v = v_ref[0]                                   # (N, E) bf16
    # v_proj: bf16 operands on the MXU, f32 accumulation, bias added in f32.
    vp = jnp.dot(v, wv_ref[...],
                 preferred_element_type=jnp.float32) + bv_ref[...]   # (N, D) f32
    vp_bf = vp.astype(jnp.bfloat16)

    d = vp.shape[-1]
    c = d // num_heads
    nq = o_ref.shape[1]
    e = o_ref.shape[2]

    # Fused head mixing + out_proj: each head's (NQ, c) result is immediately
    # projected with its slice of out_proj weights and accumulated into a
    # full-width (NQ, E) f32 accumulator -- no narrow concatenate.
    acc = jnp.zeros((nq, e), jnp.float32)
    for h in range(num_heads):
        a_h = attn_ref[0, h]                               # (NQ, N) bf16
        v_h = vp_bf[:, h * c:(h + 1) * c]                  # (N, c)  bf16
        head = jnp.dot(a_h, v_h,
                       preferred_element_type=jnp.float32)  # (NQ, c) f32
        acc = acc + jnp.dot(head.astype(jnp.bfloat16),
                            wo_ref[h * c:(h + 1) * c, :],
                            preferred_element_type=jnp.float32)  # (NQ, E) f32

    o = acc + bo_ref[...]                                  # (NQ, E) f32

    # dropout: identity (inference semantics)
    # TODO(synk): stochastic dropout (p=0.1, training mode) not reproduced; identity used.

    # LayerNorm over last dim, eps=1e-6 (biased variance as in PyTorch), f32 math.
    mean = jnp.mean(o, axis=-1, keepdims=True)
    var = jnp.mean((o - mean) ** 2, axis=-1, keepdims=True)
    y = (o - mean) * jax.lax.rsqrt(var + eps)
    y = y * gamma_ref[...] + beta_ref[...]

    o_ref[0] = y.astype(o_ref.dtype)


def muti_head_attention1(v, attn, params, *, num_heads, eps=1e-6):
    """v: (B, N, E) f32; attn: (B, H, NQ, N) f32. Returns (NQ, E) = out1[0]."""
    # The module returns out1[0]; only batch 0 is ever needed -> slice before
    # the kernel so we do not compute (B-1) wasted grid steps.
    v = v[:1]
    attn = attn[:1]

    B, N, E = v.shape
    _, H, NQ, _ = attn.shape
    wv, bv, wo, bo, gamma, beta = params
    D = wv.shape[1]
    c = D // num_heads

    # bf16 operands for the bf16-native MXUs (halves operand DMA bytes too);
    # accumulation and the LayerNorm epilogue stay in f32 inside the kernel.
    v_bf = v.astype(jnp.bfloat16)
    attn_bf = attn.astype(jnp.bfloat16)
    wv_bf = wv.astype(jnp.bfloat16)
    wo_bf = wo.astype(jnp.bfloat16)

    kernel = functools.partial(_mha1_kernel, num_heads=num_heads, eps=eps)

    flops = int(B * (2 * N * E * D + 2 * H * NQ * N * c + 2 * NQ * D * E))
    bytes_accessed = int(
        B * N * E * 2 + B * H * NQ * N * 2      # v, attn (bf16)
        + E * D * 2 + D * E * 2                 # wv, wo (bf16)
        + 4 * (D + 3 * E)                       # bv, bo, gamma, beta (f32)
        + B * NQ * E * 4)                       # output (f32)

    # NOTE: at demo shapes one grid step per batch is fine; for production N/NQ
    # add reduction tiling over N (last, "arbitrary"), split NQ into >=2
    # parallel tiles (v7x dual-TC), set vmem_limit_bytes explicitly (v7x has
    # 64 MiB), and present a lane-dense (>=128-wide) output slab.
    out = pl.pallas_call(
        kernel,
        out_shape=jax.ShapeDtypeStruct((B, NQ, E), jnp.float32),
        grid_spec=pltpu.PrefetchScalarGridSpec(
            num_scalar_prefetch=0,
            grid=(B,),
            in_specs=[
                pl.BlockSpec((1, N, E), lambda i: (i, 0, 0)),
                pl.BlockSpec((1, H, NQ, N), lambda i: (i, 0, 0, 0)),
                pl.BlockSpec((E, D), lambda i: (0, 0)),
                pl.BlockSpec((1, D), lambda i: (0, 0)),
                pl.BlockSpec((D, E), lambda i: (0, 0)),
                pl.BlockSpec((1, E), lambda i: (0, 0)),
                pl.BlockSpec((1, E), lambda i: (0, 0)),
                pl.BlockSpec((1, E), lambda i: (0, 0)),
            ],
            out_specs=pl.BlockSpec((1, NQ, E), lambda i: (i, 0, 0)),
        ),
        compiler_params=pltpu.CompilerParams(
            dimension_semantics=("parallel",)),
        cost_estimate=pl.CostEstimate(
            flops=flops, transcendentals=0, bytes_accessed=bytes_accessed),
    )(v_bf, attn_bf, wv_bf, bv, wo_bf, bo, gamma, beta)

    return out[0]


def init_params(key, embedding_dim, internal_dim):
    """Deterministic parameter init (shapes match the PyTorch module)."""
    k1, k2, k3, k4 = jax.random.split(key, 4)
    # weights stored as (in_dim, out_dim) for x @ W
    s_v = 1.0 / jnp.sqrt(embedding_dim)
    s_o = 1.0 / jnp.sqrt(internal_dim)
    wv = jax.random.uniform(k1, (embedding_dim, internal_dim), jnp.float32, -s_v, s_v)
    bv = jax.random.uniform(k2, (1, internal_dim), jnp.float32, -s_v, s_v)
    wo = jax.random.uniform(k3, (internal_dim, embedding_dim), jnp.float32, -s_o, s_o)
    bo = jax.random.uniform(k4, (1, embedding_dim), jnp.float32, -s_o, s_o)
    gamma = jnp.ones((1, embedding_dim), jnp.float32)
    beta = jnp.zeros((1, embedding_dim), jnp.float32)
    return (wv, bv, wo, bo, gamma, beta)


if __name__ == "__main__":
    # Small shapes consistent with the module.
    B, N, E = 2, 8, 32
    num_heads = 2
    downsample_rate = 1
    D = E // downsample_rate           # internal_dim
    NQ = 8                             # query tokens in attn

    key = jax.random.PRNGKey(0)
    kp, kv_, ka = jax.random.split(key, 3)

    params = init_params(kp, E, D)
    v = jax.random.normal(kv_, (B, N, E), jnp.float32)
    attn = jax.random.normal(ka, (B, num_heads, NQ, N), jnp.float32)

    out = muti_head_attention1(v, attn, params, num_heads=num_heads)
    out = jax.block_until_ready(out)

    # sanity: shape matches PyTorch's out1[0] -> (NQ, E)
    assert out.shape == (NQ, E), out.shape
    assert jnp.all(jnp.isfinite(out))

    print("KERNEL_OK")
</pallas_src>

<mosaic_0001>
module attributes {stable_mosaic.version = 11 : i64} {
  func.func @_mha1_kernel(%arg0: i32, %arg1: memref<1x8x32xbf16, #tpu.memory_space<vmem>>, %arg2: memref<1x2x8x8xbf16, #tpu.memory_space<vmem>>, %arg3: memref<32x32xbf16, #tpu.memory_space<vmem>>, %arg4: memref<1x32xf32, #tpu.memory_space<vmem>>, %arg5: memref<32x32xbf16, #tpu.memory_space<vmem>>, %arg6: memref<1x32xf32, #tpu.memory_space<vmem>>, %arg7: memref<1x32xf32, #tpu.memory_space<vmem>>, %arg8: memref<1x32xf32, #tpu.memory_space<vmem>>, %arg9: memref<1x8x32xf32, #tpu.memory_space<vmem>>) attributes {dimension_semantics = [#tpu.dimension_semantics<parallel>], iteration_bounds = array<i64: 1>, scalar_prefetch = 0 : i64, scratch_operands = 0 : i64, tpu.core_type = #tpu.core_type<tc>, window_params = [{transform_indices = @transform_0, window_bounds = array<i64: 1, 8, 32>}, {transform_indices = @transform_1, window_bounds = array<i64: 1, 2, 8, 8>}, {pipeline_mode = #tpu.pipeline_mode<synchronous>, transform_indices = @transform_2, window_bounds = array<i64: 32, 32>}, {pipeline_mode = #tpu.pipeline_mode<synchronous>, transform_indices = @transform_3, window_bounds = array<i64: 1, 32>}, {pipeline_mode = #tpu.pipeline_mode<synchronous>, transform_indices = @transform_4, window_bounds = array<i64: 32, 32>}, {pipeline_mode = #tpu.pipeline_mode<synchronous>, transform_indices = @transform_5, window_bounds = array<i64: 1, 32>}, {pipeline_mode = #tpu.pipeline_mode<synchronous>, transform_indices = @transform_6, window_bounds = array<i64: 1, 32>}, {pipeline_mode = #tpu.pipeline_mode<synchronous>, transform_indices = @transform_7, window_bounds = array<i64: 1, 32>}, {transform_indices = @transform_8, window_bounds = array<i64: 1, 8, 32>}]} {
    %c0 = arith.constant 0 : index
    %c0_0 = arith.constant 0 : index
    %c0_1 = arith.constant 0 : index
    %0 = vector.load %arg1[%c0, %c0_0, %c0_1] : memref<1x8x32xbf16, #tpu.memory_space<vmem>>, vector<1x8x32xbf16>
    %1 = vector.shape_cast %0 : vector<1x8x32xbf16> to vector<8x32xbf16>
    %c0_2 = arith.constant 0 : index
    %c0_3 = arith.constant 0 : index
    %2 = vector.load %arg3[%c0_2, %c0_3] : memref<32x32xbf16, #tpu.memory_space<vmem>>, vector<32x32xbf16>
    %cst = arith.constant dense<0.000000e+00> : vector<8x32xf32>
    %3 = tpu.matmul %1, %2, %cst {dimension_numbers = #tpu.dot_dimension_numbers<[1], [0], [0], [1], [0, 0, 1, 1], [], []>} : vector<8x32xbf16>, vector<32x32xbf16>, vector<8x32xf32> -> vector<8x32xf32>
    %c0_4 = arith.constant 0 : index
    %c0_5 = arith.constant 0 : index
    %4 = vector.load %arg4[%c0_4, %c0_5] : memref<1x32xf32, #tpu.memory_space<vmem>>, vector<1x32xf32>
    %5 = vector.broadcast %4 : vector<1x32xf32> to vector<8x32xf32>
    %6 = arith.addf %3, %5 : vector<8x32xf32>
    %7 = arith.truncf %6 : vector<8x32xf32> to vector<8x32xbf16>
    %cst_6 = arith.constant 0.000000e+00 : f32
    %8 = vector.broadcast %cst_6 : f32 to vector<8x32xf32>
    %c0_7 = arith.constant 0 : index
    %c0_8 = arith.constant 0 : index
    %c0_9 = arith.constant 0 : index
    %c0_10 = arith.constant 0 : index
    %9 = vector.load %arg2[%c0_7, %c0_8, %c0_9, %c0_10] : memref<1x2x8x8xbf16, #tpu.memory_space<vmem>>, vector<1x1x8x8xbf16>
    %10 = vector.shape_cast %9 : vector<1x1x8x8xbf16> to vector<8x8xbf16>
    %11 = vector.extract_strided_slice %7 {offsets = [0, 0], sizes = [8, 16], strides = [1, 1]} : vector<8x32xbf16> to vector<8x16xbf16>
    %cst_11 = arith.constant dense<0.000000e+00> : vector<8x16xf32>
    %12 = tpu.matmul %10, %11, %cst_11 {dimension_numbers = #tpu.dot_dimension_numbers<[1], [0], [0], [1], [0, 0, 1, 1], [], []>} : vector<8x8xbf16>, vector<8x16xbf16>, vector<8x16xf32> -> vector<8x16xf32>
    %13 = arith.truncf %12 : vector<8x16xf32> to vector<8x16xbf16>
    %c0_12 = arith.constant 0 : index
    %c0_13 = arith.constant 0 : index
    %14 = vector.load %arg5[%c0_12, %c0_13] : memref<32x32xbf16, #tpu.memory_space<vmem>>, vector<16x32xbf16>
    %cst_14 = arith.constant dense<0.000000e+00> : vector<8x32xf32>
    %15 = tpu.matmul %13, %14, %cst_14 {dimension_numbers = #tpu.dot_dimension_numbers<[1], [0], [0], [1], [0, 0, 1, 1], [], []>} : vector<8x16xbf16>, vector<16x32xbf16>, vector<8x32xf32> -> vector<8x32xf32>
    %16 = arith.addf %8, %15 : vector<8x32xf32>
    %c0_15 = arith.constant 0 : index
    %c1 = arith.constant 1 : index
    %c0_16 = arith.constant 0 : index
    %c0_17 = arith.constant 0 : index
    %17 = vector.load %arg2[%c0_15, %c1, %c0_16, %c0_17] : memref<1x2x8x8xbf16, #tpu.memory_space<vmem>>, vector<1x1x8x8xbf16>
    %18 = vector.shape_cast %17 : vector<1x1x8x8xbf16> to vector<8x8xbf16>
    %19 = vector.extract_strided_slice %7 {offsets = [0, 16], sizes = [8, 16], strides = [1, 1]} : vector<8x32xbf16> to vector<8x16xbf16>
    %cst_18 = arith.constant dense<0.000000e+00> : vector<8x16xf32>
    %20 = tpu.matmul %18, %19, %cst_18 {dimension_numbers = #tpu.dot_dimension_numbers<[1], [0], [0], [1], [0, 0, 1, 1], [], []>} : vector<8x8xbf16>, vector<8x16xbf16>, vector<8x16xf32> -> vector<8x16xf32>
    %21 = arith.truncf %20 : vector<8x16xf32> to vector<8x16xbf16>
    %c16 = arith.constant 16 : index
    %c0_19 = arith.constant 0 : index
    %22 = vector.load %arg5[%c16, %c0_19] : memref<32x32xbf16, #tpu.memory_space<vmem>>, vector<16x32xbf16>
    %cst_20 = arith.constant dense<0.000000e+00> : vector<8x32xf32>
    %23 = tpu.matmul %21, %22, %cst_20 {dimension_numbers = #tpu.dot_dimension_numbers<[1], [0], [0], [1], [0, 0, 1, 1], [], []>} : vector<8x16xbf16>, vector<16x32xbf16>, vector<8x32xf32> -> vector<8x32xf32>
    %24 = arith.addf %16, %23 : vector<8x32xf32>
    %c0_21 = arith.constant 0 : index
    %c0_22 = arith.constant 0 : index
    %25 = vector.load %arg6[%c0_21, %c0_22] : memref<1x32xf32, #tpu.memory_space<vmem>>, vector<1x32xf32>
    %26 = vector.broadcast %25 : vector<1x32xf32> to vector<8x32xf32>
    %27 = arith.addf %24, %26 : vector<8x32xf32>
    %cst_23 = arith.constant dense<0.000000e+00> : vector<8xf32>
    %28 = vector.multi_reduction <add>, %27, %cst_23 [1] : vector<8x32xf32> to vector<8xf32>
    %29 = vector.shape_cast %28 : vector<8xf32> to vector<8x1xf32>
    %cst_24 = arith.constant 3.200000e+01 : f32
    %30 = vector.broadcast %cst_24 : f32 to vector<8x1xf32>
    %31 = arith.divf %29, %30 : vector<8x1xf32>
    %32 = vector.broadcast %31 : vector<8x1xf32> to vector<8x32xf32>
    %33 = arith.subf %27, %32 : vector<8x32xf32>
    %34 = arith.mulf %33, %33 : vector<8x32xf32>
    %cst_25 = arith.constant dense<0.000000e+00> : vector<8xf32>
    %35 = vector.multi_reduction <add>, %34, %cst_25 [1] : vector<8x32xf32> to vector<8xf32>
    %36 = vector.shape_cast %35 : vector<8xf32> to vector<8x1xf32>
    %cst_26 = arith.constant 3.200000e+01 : f32
    %37 = vector.broadcast %cst_26 : f32 to vector<8x1xf32>
    %38 = arith.divf %36, %37 : vector<8x1xf32>
    %39 = vector.broadcast %31 : vector<8x1xf32> to vector<8x32xf32>
    %40 = arith.subf %27, %39 : vector<8x32xf32>
    %cst_27 = arith.constant 9.99999997E-7 : f32
    %41 = vector.broadcast %cst_27 : f32 to vector<8x1xf32>
    %42 = arith.addf %38, %41 : vector<8x1xf32>
    %43 = math.rsqrt %42 : vector<8x1xf32>
    %44 = vector.broadcast %43 : vector<8x1xf32> to vector<8x32xf32>
    %45 = arith.mulf %40, %44 : vector<8x32xf32>
    %c0_28 = arith.constant 0 : index
    %c0_29 = arith.constant 0 : index
    %46 = vector.load %arg7[%c0_28, %c0_29] : memref<1x32xf32, #tpu.memory_space<vmem>>, vector<1x32xf32>
    %47 = vector.broadcast %46 : vector<1x32xf32> to vector<8x32xf32>
    %48 = arith.mulf %45, %47 : vector<8x32xf32>
    %c0_30 = arith.constant 0 : index
    %c0_31 = arith.constant 0 : index
    %49 = vector.load %arg8[%c0_30, %c0_31] : memref<1x32xf32, #tpu.memory_space<vmem>>, vector<1x32xf32>
    %50 = vector.broadcast %49 : vector<1x32xf32> to vector<8x32xf32>
    %51 = arith.addf %48, %50 : vector<8x32xf32>
    %c0_32 = arith.constant 0 : index
    %c0_33 = arith.constant 0 : index
    %c0_34 = arith.constant 0 : index
    %52 = vector.load %arg9[%c0_32, %c0_33, %c0_34] : memref<1x8x32xf32, #tpu.memory_space<vmem>>, vector<1x8x32xf32>
    %53 = vector.shape_cast %52 : vector<1x8x32xf32> to vector<8x32xf32>
    %54 = vector.shape_cast %51 : vector<8x32xf32> to vector<1x8x32xf32>
    tpu.vector_store %arg9[%c0_32, %c0_33, %c0_34], %54 {strides = array<i32>} : memref<1x8x32xf32, #tpu.memory_space<vmem>>, vector<1x8x32xf32>,
    return
  }
  func.func @transform_0(%arg0: i32) -> (i32, i32, i32) {
    %c0_i32 = arith.constant 0 : i32
    %c0_i32_0 = arith.constant 0 : i32
    %c0_i32_1 = arith.constant 0 : i32
    return %arg0, %c0_i32, %c0_i32_0 : i32, i32, i32
  }
  func.func @transform_1(%arg0: i32) -> (i32, i32, i32, i32) {
    %c0_i32 = arith.constant 0 : i32
    %c0_i32_0 = arith.constant 0 : i32
    %c0_i32_1 = arith.constant 0 : i32
    %c0_i32_2 = arith.constant 0 : i32
    return %arg0, %c0_i32, %c0_i32_0, %c0_i32_1 : i32, i32, i32, i32
  }
  func.func @transform_2(%arg0: i32) -> (i32, i32) {
    %c0_i32 = arith.constant 0 : i32
    %c0_i32_0 = arith.constant 0 : i32
    %c0_i32_1 = arith.constant 0 : i32
    return %c0_i32, %c0_i32_0 : i32, i32
  }
  func.func @transform_3(%arg0: i32) -> (i32, i32) {
    %c0_i32 = arith.constant 0 : i32
    %c0_i32_0 = arith.constant 0 : i32
    %c0_i32_1 = arith.constant 0 : i32
    return %c0_i32, %c0_i32_0 : i32, i32
  }
  func.func @transform_4(%arg0: i32) -> (i32, i32) {
    %c0_i32 = arith.constant 0 : i32
    %c0_i32_0 = arith.constant 0 : i32
    %c0_i32_1 = arith.constant 0 : i32
    return %c0_i32, %c0_i32_0 : i32, i32
  }
  func.func @transform_5(%arg0: i32) -> (i32, i32) {
    %c0_i32 = arith.constant 0 : i32
    %c0_i32_0 = arith.constant 0 : i32
    %c0_i32_1 = arith.constant 0 : i32
    return %c0_i32, %c0_i32_0 : i32, i32
  }
  func.func @transform_6(%arg0: i32) -> (i32, i32) {
    %c0_i32 = arith.constant 0 : i32
    %c0_i32_0 = arith.constant 0 : i32
    %c0_i32_1 = arith.constant 0 : i32
    return %c0_i32, %c0_i32_0 : i32, i32
  }
  func.func @transform_7(%arg0: i32) -> (i32, i32) {
    %c0_i32 = arith.constant 0 : i32
    %c0_i32_0 = arith.constant 0 : i32
    %c0_i32_1 = arith.constant 0 : i32
    return %c0_i32, %c0_i32_0 : i32, i32
  }
  func.func @transform_8(%arg0: i32) -> (i32, i32, i32) {
    %c0_i32 = arith.constant 0 : i32
    %c0_i32_0 = arith.constant 0 : i32
    %c0_i32_1 = arith.constant 0 : i32
    return %arg0, %c0_i32, %c0_i32_0 : i32, i32, i32
  }
}

</mosaic_0001>

<llo_original>
// kernel: tpu_custom_call.1
$region0: #{tpu_custom_call.1}
  #allocation0 [shape = 'u32[]', space=smem, size = 0x4, offset = 0x4, fixed_abs, tag = 'smem constant byte address 0x4 - core index']
  #allocation1 [shape = 'u32[72,128]{1,0:T(1,128)}', space=vmem, size = 0x9000, scoped, tag = 'internal scratch']
  %s0 = inlined_call_operand.hbm [shape: bf16[1,8,32], index: 0, kind: input, shape index: {}]
  %s1 = inlined_call_operand.hbm [shape: bf16[1,2,8,8], index: 1, kind: input, shape index: {}]
  %s2 = inlined_call_operand.hbm [shape: bf16[32,32], index: 2, kind: input, shape index: {}]
  %s3 = inlined_call_operand.vmem [shape: f32[1,32], index: 3, kind: input, shape index: {}]
  %s4 = inlined_call_operand.hbm [shape: bf16[32,32], index: 4, kind: input, shape index: {}]
  %s5 = inlined_call_operand.vmem [shape: f32[1,32], index: 5, kind: input, shape index: {}]
  %s6 = inlined_call_operand.vmem [shape: f32[1,32], index: 6, kind: input, shape index: {}]
  %s7 = inlined_call_operand.vmem [shape: f32[1,32], index: 7, kind: input, shape index: {}]
  %s8 = inlined_call_operand.hbm [shape: f32[1,8,32], index: 8, kind: output, shape index: {}]
  %s9 = sld [smem:[#allocation0]]
  $region58: #{tpu_custom_call.1} parent=0
    _
  %s11 = ssub.s32 1, %s9
  %s12 = scalar_select 0, %s11, %s9
  $region1: #{tpu_custom_call.1} parent=0
    #allocation2 [shape = 'u8[2048]{0}', space=vmem, size = 0x800, scoped, tag = 'input window, operand 0, single buffered']
    #allocation3 [shape = 's32[1]{0}', space=sflag, size = 0x4, scoped, tag = 'scoped memory for tpu_custom_call.1']
    #allocation4 [shape = 's32[1]{0}', space=sflag, size = 0x4, scoped, tag = 'scoped memory for tpu_custom_call.1']
    #allocation5 [shape = 'u8[4096]{0}', space=vmem, size = 0x1000, scoped, tag = 'input window, operand 1, single buffered']
    #allocation6 [shape = 's32[1]{0}', space=sflag, size = 0x4, scoped, tag = 'scoped memory for tpu_custom_call.1']
    #allocation7 [shape = 'u8[8192]{0}', space=vmem, size = 0x2000, scoped, tag = 'input window, operand 2, single buffered']
    #allocation8 [shape = 'u8[8192]{0}', space=vmem, size = 0x2000, scoped, tag = 'input window, operand 4, single buffered']
    #allocation9 [shape = 's32[1]{0}', space=sflag, size = 0x4, scoped, tag = 'scoped memory for tpu_custom_call.1']
    #allocation10 [shape = 'u8[4096]{0}', space=vmem, size = 0x1000, scoped, tag = 'output window, operand 0, single buffered']
    %13 = vsyncpa [#allocation3], 0
    %14 = vsyncpa [#allocation6], 0
    %15 = vsyncpa [#allocation9], 0
    %16 = vsyncpa [#allocation4], 0
    // Predicated region
    $region2: #{tpu_custom_call.1} parent=1 // pred_check
      _
    $region3: #{tpu_custom_call.1} parent=1 // pred_check_branch
      %18 = sbr.rel (0) target = $region5
    $region4: #{tpu_custom_call.1} parent=1 // pred_region
      %20 = vsyncadd [#allocation3], 0
      %s22 = sshll.u32 %s0, 4
      %s23 = int_to_ptr.hbm [resolvable:$true] %s22
      %s24 = sshll.u32 [#allocation2], 4
      %s25 = int_to_ptr.vmem [resolvable:$true] %s24
      %27 = dma.hbm_to_vmem [thread:$0]  %s23, 64, %s25, [#allocation3]
    $region5: #{tpu_custom_call.1} parent=1 // pred_fallthru
      _
    // Predicated region
    $region6: #{tpu_custom_call.1} parent=1 // pred_check
      _
    $region7: #{tpu_custom_call.1} parent=1 // pred_check_branch
      %29 = sbr.rel (0) target = $region9
    $region8: #{tpu_custom_call.1} parent=1 // pred_region
      %31 = vsyncadd [#allocation6], 0
      %s32 = sshll.u32 %s1, 4
      %s33 = int_to_ptr.hbm [resolvable:$true] %s32
      %s34 = sshll.u32 [#allocation5], 4
      %s35 = int_to_ptr.vmem [resolvable:$true] %s34
      %40 = dma.hbm_to_vmem [thread:$0]  %s33, 128, %s35, [#allocation6], 64, 64, 4
    $region9: #{tpu_custom_call.1} parent=1 // pred_fallthru
      _
    // Predicated region
    $region10: #{tpu_custom_call.1} parent=1 // pred_check
      _
    $region11: #{tpu_custom_call.1} parent=1 // pred_check_branch
      %42 = sbr.rel (0) target = $region13
    $region12: #{tpu_custom_call.1} parent=1 // pred_region
      %44 = vsyncadd [#allocation6], 0
      %s45 = sshll.u32 %s2, 4
      %s46 = int_to_ptr.hbm [resolvable:$true] %s45
      %s47 = sshll.u32 [#allocation7], 4
      %s48 = int_to_ptr.vmem [resolvable:$true] %s47
      %53 = dma.hbm_to_vmem [thread:$0]  %s46, 256, %s48, [#allocation6], 64, 64, 4
    $region13: #{tpu_custom_call.1} parent=1 // pred_fallthru
      _
    // Predicated region
    $region14: #{tpu_custom_call.1} parent=1 // pred_check
      _
    $region15: #{tpu_custom_call.1} parent=1 // pred_check_branch
      %55 = sbr.rel (0) target = $region17
    $region16: #{tpu_custom_call.1} parent=1 // pred_region
      _
    $region17: #{tpu_custom_call.1} parent=1 // pred_fallthru
      _
    // Predicated region
    $region18: #{tpu_custom_call.1} parent=1 // pred_check
      _
    $region19: #{tpu_custom_call.1} parent=1 // pred_check_branch
      %57 = sbr.rel (0) target = $region21
    $region20: #{tpu_custom_call.1} parent=1 // pred_region
      %59 = vsyncadd [#allocation9], 0
      %s60 = sshll.u32 %s4, 4
      %s61 = int_to_ptr.hbm [resolvable:$true] %s60
      %s62 = sshll.u32 [#allocation8], 4
      %s63 = int_to_ptr.vmem [resolvable:$true] %s62
      %68 = dma.hbm_to_vmem [thread:$0]  %s61, 256, %s63, [#allocation9], 64, 64, 4
    $region21: #{tpu_custom_call.1} parent=1 // pred_fallthru
      _
    // Predicated region
    $region22: #{tpu_custom_call.1} parent=1 // pred_check
      _
    $region23: #{tpu_custom_call.1} parent=1 // pred_check_branch
      %70 = sbr.rel (0) target = $region25
    $region24: #{tpu_custom_call.1} parent=1 // pred_region
      _
    $region25: #{tpu_custom_call.1} parent=1 // pred_fallthru
      _
    // Predicated region
    $region26: #{tpu_custom_call.1} parent=1 // pred_check
      _
    $region27: #{tpu_custom_call.1} parent=1 // pred_check_branch
      %72 = sbr.rel (0) target = $region29
    $region28: #{tpu_custom_call.1} parent=1 // pred_region
      _
    $region29: #{tpu_custom_call.1} parent=1 // pred_fallthru
      _
    // Predicated region
    $region30: #{tpu_custom_call.1} parent=1 // pred_check
      _
    $region31: #{tpu_custom_call.1} parent=1 // pred_check_branch
      %74 = sbr.rel (0) target = $region33
    $region32: #{tpu_custom_call.1} parent=1 // pred_region
      _
    $region33: #{tpu_custom_call.1} parent=1 // pred_fallthru
      _
    // Predicated region
    $region34: #{tpu_custom_call.1} parent=1 // pred_check
      _
    $region35: #{tpu_custom_call.1} parent=1 // pred_check_branch
      %76 = sbr.rel (0) target = $region37
    $region36: #{tpu_custom_call.1} parent=1 // pred_region
      %78 = dma.done [#allocation3], 64
    $region37: #{tpu_custom_call.1} parent=1 // pred_fallthru
      _
    // Predicated region
    $region38: #{tpu_custom_call.1} parent=1 // pred_check
      _
    $region39: #{tpu_custom_call.1} parent=1 // pred_check_branch
      %80 = sbr.rel (0) target = $region41
    $region40: #{tpu_custom_call.1} parent=1 // pred_region
      %82 = dma.done [#allocation6], 128
    $region41: #{tpu_custom_call.1} parent=1 // pred_fallthru
      _
    // Predicated region
    $region42: #{tpu_custom_call.1} parent=1 // pred_check
      _
    $region43: #{tpu_custom_call.1} parent=1 // pred_check_branch
      %84 = sbr.rel (0) target = $region45
    $region44: #{tpu_custom_call.1} parent=1 // pred_region
      %86 = dma.done [#allocation6], 256
    $region45: #{tpu_custom_call.1} parent=1 // pred_fallthru
      _
    // Predicated region
    $region46: #{tpu_custom_call.1} parent=1 // pred_check
      _
    $region47: #{tpu_custom_call.1} parent=1 // pred_check_branch
      %88 = sbr.rel (0) target = $region49
    $region48: #{tpu_custom_call.1} parent=1 // pred_region
      %90 = dma.done [#allocation9], 256
    $region49: #{tpu_custom_call.1} parent=1 // pred_fallthru
      _
    %v92 = vld [vmem:[#allocation2] sm:$0xf]
    %v93 = vld [vmem:[#allocation7] sm:$0xf]
    %v94 = vld [vmem:[#allocation7 + $0x4] sm:$0xf]
    %v95 = vld [vmem:[#allocation7 + $0x8] sm:$0xf]
    %v96 = vld [vmem:[#allocation7 + $0xc] sm:$0xf]
    %v97 = vld [vmem:[%s3] sm:$0x1]
    %v99 = vperm.slane %v97, 0
    %v105 = vunpack.c.l.b16 %v93
    %v106 = vunpack.c.l.b16 %v94
    %v107 = vunpack.c.l.b16 %v95
    %v108 = vunpack.c.l.b16 %v96
    %v109 = vpack.c.b16 %v106, %v105
    %v110 = vpack.c.b16 %v108, %v107
    %vm113 = vcmask 261120
    %v115 = vsel %vm113, %v92, 0
    %117 = vmatpush.bf16.msra.mxu0 0
    %118 = vmatpush.bf16.msra.mxu0 0
    %119 = vmatpush.bf16.msra.mxu0 0
    %120 = vmatpush.bf16.msra.mxu0 0
    %121 = vmatpush.bf16.msra.mxu0 0
    %122 = vmatpush.bf16.msra.mxu0 0
    %123 = vmatpush.bf16.msra.mxu0 %v110
    %124 = vmatpush.bf16.msra.mxu0 %v109
    %125 = vmatmul.bf16.gmra.mxu0 %v115
    %v126 = vpop.f32.mrf.mxu0
    %v127 = vadd.f32 %v99, %v126
    %v128 = vpop.f32.mrf.mxu0
    %129 = vdwg.mxu0
    %v130 = vpack.c.bf16 %v127, %v127
    %v131 = vld [vmem:[#allocation5] sm:$0xf]
    %vm132 = vcmask 64512
    %v134 = vsel %vm132, %v131, 0
    %vm136 = vcmask 1043456
    %v138 = vsel %vm136, %v130, 0
    %140 = vmatpush.bf16.msra.mxu0 0
    %141 = vmatpush.bf16.msra.mxu0 0
    %142 = vmatpush.bf16.msra.mxu0 0
    %143 = vmatpush.bf16.msra.mxu0 0
    %144 = vmatpush.bf16.msra.mxu0 0
    %145 = vmatpush.bf16.msra.mxu0 0
    %146 = vmatpush.bf16.msra.mxu0 0
    %147 = vmatpush.bf16.msra.mxu0 %v138
    %148 = vmatmul.bf16.gmra.mxu0 %v134
    %v149 = vpop.f32.mrf.mxu0
    %v150 = vadd.f32 0.0, %v149
    %v151 = vpop.f32.mrf.mxu0
    %152 = vdwg.mxu0
    %v153 = vpack.c.bf16 %v150, %v150
    %v154 = vld [vmem:[#allocation8] sm:$0xf]
    %v155 = vld [vmem:[#allocation8 + $0x4] sm:$0xf]
    %s156 = scalar_lea.vmem [#allocation5], 4
    %v157 = vld [vmem:[%s156] sm:$0xf]
    %v159 = vunpack.c.l.b16 %v130
    %v160 = vpack.c.b16 %v159, %v159
    %161 = vrot.lane.b32.xlu0 %v160, 112
    %v162 = vpop.permute.xlu0 %161
    %v164 = vsel %vm132, %v157, 0
    %v167 = vsel %vm136, %v162, 0
    %169 = vmatpush.bf16.msra.mxu0 0
    %170 = vmatpush.bf16.msra.mxu0 0
    %171 = vmatpush.bf16.msra.mxu0 0
    %172 = vmatpush.bf16.msra.mxu0 0
    %173 = vmatpush.bf16.msra.mxu0 0
    %174 = vmatpush.bf16.msra.mxu0 0
    %175 = vmatpush.bf16.msra.mxu0 0
    %176 = vmatpush.bf16.msra.mxu0 %v167
    %177 = vmatmul.bf16.gmra.mxu0 %v164
    %v178 = vpop.f32.mrf.mxu0
    %v179 = vadd.f32 0.0, %v178
    %v180 = vpop.f32.mrf.mxu0
    %181 = vdwg.mxu0
    %v182 = vpack.c.bf16 %v179, %v179
    %v183 = vld [vmem:[#allocation8 + $0x8] sm:$0xf]
    %v184 = vld [vmem:[#allocation8 + $0xc] sm:$0xf]
    %v187 = vunpack.c.l.b16 %v183
    %v188 = vunpack.c.l.b16 %v184
    %v189 = vpack.c.b16 %v188, %v187
    %vm191 = vcmask 130048
    %v193 = vsel %vm191, %v182, 0
    %195 = vmatpush.bf16.msra.mxu0 0
    %196 = vmatpush.bf16.msra.mxu0 0
    %197 = vmatpush.bf16.msra.mxu0 0
    %198 = vmatpush.bf16.msra.mxu0 0
    %199 = vmatpush.bf16.msra.mxu0 0
    %200 = vmatpush.bf16.msra.mxu0 0
    %201 = vmatpush.bf16.msra.mxu0 0
    %202 = vmatpush.bf16.msra.mxu0 %v189
    %203 = vmatmul.bf16.gmra.mxu0 %v193
    %v204 = vpop.f32.mrf.mxu0
    %v205 = vadd.f32 0.0, %v204
    %v206 = vpop.f32.mrf.mxu0
    %207 = vdwg.mxu0
    %v210 = vunpack.c.l.b16 %v154
    %v211 = vunpack.c.l.b16 %v155
    %v212 = vpack.c.b16 %v211, %v210
    %v215 = vsel %vm191, %v153, 0
    %217 = vmatpush.bf16.msra.mxu0 0
    %218 = vmatpush.bf16.msra.mxu0 0
    %219 = vmatpush.bf16.msra.mxu0 0
    %220 = vmatpush.bf16.msra.mxu0 0
    %221 = vmatpush.bf16.msra.mxu0 0
    %222 = vmatpush.bf16.msra.mxu0 0
    %223 = vmatpush.bf16.msra.mxu0 0
    %224 = vmatpush.bf16.msra.mxu0 %v212
    %225 = vmatmul.bf16.gmra.mxu0 %v215
    %v226 = vpop.f32.mrf.mxu0
    %v227 = vadd.f32 %v205, %v226
    %v228 = vpop.f32.mrf.mxu0
    %229 = vdwg.mxu0
    %v230 = vld [vmem:[%s5] sm:$0x1]
    %v232 = vperm.slane %v230, 0
    %v234 = vadd.f32 %v227, %v232
    %v235 = vsel %vm113, %v234, 0.0
    %236 = vadd.xlane.f32.xlu0 %v235
    %v237 = vpop.xlane.xlu0 %236
    %v238 = vrcp.pop 32.0
    %v239 = vmul.f32 32.0, %v238
    %v240 = vsub.f32 1.0, %v239
    %v241 = vmul.f32 %v238, %v240
    %v242 = vadd.f32 %v238, %v241
    %vm243 = vweird.f32 %v238
    %v244 = vsel %vm243, %v238, %v242
    %v245 = vmul.f32 %v237, %v244
    %v246 = vsub.f32 %v234, %v245
    %v247 = vmul.f32 %v246, %v246
    %v248 = vsel %vm113, %v247, 0.0
    %249 = vadd.xlane.f32.xlu0 %v248
    %v250 = vpop.xlane.xlu0 %249
    %v251 = vmul.f32 %v250, %v244
    %v252 = vadd.f32 %v251, 1e-06
    %v253 = vrsqrt.pop %v252
    %v254 = vmul.f32 %v253, %v252
    %v255 = vmul.f32 %v254, %v253
    %v256 = vmul.f32 0.5, %v255
    %v257 = vsub.f32 1.5, %v256
    %v258 = vmul.f32 %v253, %v257
    %vm259 = vweird.f32 %v252
    %vm260 = vweird.f32 %v253
    %vm261 = vmor %vm259, %vm260
    %v262 = vsel %vm261, %v253, %v258
    %v263 = vmul.f32 %v246, %v262
    %v264 = vld [vmem:[%s6] sm:$0x1]
    %v266 = vperm.slane %v264, 0
    %v268 = vmul.f32 %v263, %v266
    %v269 = vld [vmem:[%s7] sm:$0x1]
    %v271 = vperm.slane %v269, 0
    %v273 = vadd.f32 %v268, %v271
    %274 = vst.msk [vmem:[#allocation10] sm:$0xff] %vm113, %v273
    // Predicated region
    $region50: #{tpu_custom_call.1} parent=1 // pred_check
      _
    $region51: #{tpu_custom_call.1} parent=1 // pred_check_branch
      %276 = sbr.rel (0) target = $region53
    $region52: #{tpu_custom_call.1} parent=1 // pred_region
      %278 = vsyncadd [#allocation4], 0
      %s280 = sshll.u32 [#allocation10], 4
      %s281 = int_to_ptr.vmem [resolvable:$true] %s280
      %s282 = sshll.u32 %s8, 4
      %s283 = int_to_ptr.hbm [resolvable:$true] %s282
      %285 = dma.vmem_to_hbm [thread:$0]  %s281, 128, %s283, [#allocation4]
    $region53: #{tpu_custom_call.1} parent=1 // pred_fallthru
      _
    // Predicated region
    $region54: #{tpu_custom_call.1} parent=1 // pred_check
      _
    $region55: #{tpu_custom_call.1} parent=1 // pred_check_branch
      %287 = sbr.rel (0) target = $region57
    $region56: #{tpu_custom_call.1} parent=1 // pred_region
      %289 = dma.done [#allocation4], 128
    $region57: #{tpu_custom_call.1} parent=1 // pred_fallthru
      _
    %290 = vsyncpa [#allocation3], 1
    %291 = vsyncpa [#allocation6], 1
    %292 = vsyncpa [#allocation9], 1
    %293 = vsyncpa [#allocation4], 1

</llo_original>
